<compile_context>
chip_gen: v7x
topology: tpu7x:2x2x1
jax: 0.10.0
libtpu: 0.0.40
codegen_flags: <defaults>
</compile_context>

<pallas_src>
import functools

import jax
import jax.numpy as jnp
from jax import lax
from jax.experimental import pallas as pl
from jax.experimental.pallas import tpu as pltpu


def _bn_glu_normalize(h, x1, sum_ref, ssq_ref, gamma, beta, batch_size, o_ref):
    """BatchNorm (from accumulated stats) -> GLU gate -> L2 normalize -> store."""
    inv_n = 1.0 / batch_size
    mean = sum_ref[...] * inv_n
    var = ssq_ref[...] * inv_n - mean * mean
    x1n = (x1 - mean) * lax.rsqrt(var + 1e-5) * gamma + beta

    # GLU gate: sigmoid via exp + approximate reciprocal (both on the EUP).
    gate = pl.reciprocal(1.0 + jnp.exp(-x1n), approx=True)
    g = h * gate

    # F.normalize: g / max(||g||, 1e-12)  ==  g * rsqrt(max(||g||^2, 1e-24)).
    ss = jnp.sum(g * g, axis=1, keepdims=True)
    o_ref[...] = (g * lax.rsqrt(jnp.maximum(ss, 1e-24))).astype(o_ref.dtype)


def _geu_kernel_cached(x_ref, w1_ref, b1_ref, w2_ref, b2_ref, gamma_ref,
                       beta_ref, o_ref, h_ref, x1_ref, sum_ref, ssq_ref, *,
                       batch_size):
    """Phase 0: matmuls + cache h/x1 + BN stats.  Phase 1: BN/GLU/normalize."""
    phase = pl.program_id(0)   # 0: stats pass, 1: output pass
    bt = pl.program_id(1)      # batch-tile index
    tb = o_ref.shape[0]

    @pl.when(phase == 0)
    def _():
        @pl.when(bt == 0)
        def _():
            sum_ref[...] = jnp.zeros_like(sum_ref)
            ssq_ref[...] = jnp.zeros_like(ssq_ref)

        # Both matmuls on the MXU: bf16 operands, f32 accumulation.
        h = jnp.dot(x_ref[...], w1_ref[...],
                    preferred_element_type=jnp.float32) + b1_ref[...]
        x1 = jnp.dot(h.astype(jnp.bfloat16), w2_ref[...],
                     preferred_element_type=jnp.float32) + b2_ref[...]

        # Cache activations so phase 1 needs no matmuls and no x re-read.
        h_ref[bt] = h
        x1_ref[bt] = x1

        # Single-pass stats; mask batch-padding rows so full-batch BN is exact.
        row = lax.broadcasted_iota(jnp.int32, (tb, 1), 0) + bt * tb
        valid = (row < batch_size).astype(jnp.float32)
        x1m = x1 * valid
        sum_ref[...] += jnp.sum(x1m, axis=0, keepdims=True)
        ssq_ref[...] += jnp.sum(x1m * x1m, axis=0, keepdims=True)

    @pl.when(phase == 1)
    def _():
        _bn_glu_normalize(h_ref[bt], x1_ref[bt], sum_ref, ssq_ref,
                          gamma_ref[...], beta_ref[...], batch_size, o_ref)


def _geu_kernel_recompute(x_ref, w1_ref, b1_ref, w2_ref, b2_ref, gamma_ref,
                          beta_ref, o_ref, sum_ref, ssq_ref, *, batch_size):
    """Fallback when the activation cache would not fit VMEM: recompute the
    matmuls in both phases (VMEM stays bounded for arbitrary B)."""
    phase = pl.program_id(0)
    bt = pl.program_id(1)
    tb = x_ref.shape[0]

    h = jnp.dot(x_ref[...], w1_ref[...],
                preferred_element_type=jnp.float32) + b1_ref[...]
    x1 = jnp.dot(h.astype(jnp.bfloat16), w2_ref[...],
                 preferred_element_type=jnp.float32) + b2_ref[...]

    @pl.when(jnp.logical_and(phase == 0, bt == 0))
    def _():
        sum_ref[...] = jnp.zeros_like(sum_ref)
        ssq_ref[...] = jnp.zeros_like(ssq_ref)

    @pl.when(phase == 0)
    def _():
        row = lax.broadcasted_iota(jnp.int32, (tb, 1), 0) + bt * tb
        valid = (row < batch_size).astype(jnp.float32)
        x1m = x1 * valid
        sum_ref[...] += jnp.sum(x1m, axis=0, keepdims=True)
        ssq_ref[...] += jnp.sum(x1m * x1m, axis=0, keepdims=True)

    @pl.when(phase == 1)
    def _():
        _bn_glu_normalize(h, x1, sum_ref, ssq_ref, gamma_ref[...],
                          beta_ref[...], batch_size, o_ref)


def gated_embedding_unit(x, w1, b1, w2, b2, gamma, beta, *, block_b=256,
                         max_cache_bytes=16 * 1024 * 1024):
    """x: (B, D_in); w1: (D_in, D_out); w2: (D_out, D_out); b/gamma/beta: (1, D_out)."""
    B, D_in = x.shape
    D_out = w1.shape[1]

    # Batch tile: multiple of 8 sublanes, capped at block_b; pad B up to a tile.
    tb = min(int(block_b), max(8, ((B + 7) // 8) * 8))
    tb = max(8, (tb // 8) * 8)
    b_pad = ((B + tb - 1) // tb) * tb
    nb = b_pad // tb

    xb = x.astype(jnp.bfloat16)
    if b_pad != B:
        xb = jnp.pad(xb, ((0, b_pad - B), (0, 0)))
    w1b = w1.astype(jnp.bfloat16)
    w2b = w2.astype(jnp.bfloat16)
    b1f = jnp.reshape(b1, (1, D_out)).astype(jnp.float32)
    b2f = jnp.reshape(b2, (1, D_out)).astype(jnp.float32)
    gammaf = jnp.reshape(gamma, (1, D_out)).astype(jnp.float32)
    betaf = jnp.reshape(beta, (1, D_out)).astype(jnp.float32)

    out_dtype = x.dtype
    out_itemsize = jnp.dtype(out_dtype).itemsize

    # f32 VMEM cache of h and x1 across the whole (padded) batch.
    cache_bytes = 2 * b_pad * D_out * 4
    use_cache = cache_bytes <= max_cache_bytes

    # Advisory cost estimate.
    matmul_flops = 2 * b_pad * D_out * (D_in + D_out)
    flops = int(matmul_flops if use_cache else 2 * matmul_flops)
    transcendentals = int(2 * b_pad * D_out + b_pad + D_out)
    x_reads = 1 if use_cache else 2
    bytes_accessed = int(x_reads * b_pad * D_in * 2                 # x (bf16)
                         + (D_in * D_out + D_out * D_out) * 2        # bf16 weights
                         + 4 * D_out * 4                             # b1/b2/gamma/beta
                         + b_pad * D_out * out_itemsize)             # output

    # VMEM plan: double-buffered x/out tiles + resident bf16 weights + small
    # f32 vectors (padded to 8 sublanes) + scratch (stats, optional caches).
    vmem_plan = (2 * tb * D_in * 2
                 + 2 * tb * D_out * out_itemsize
                 + 2 * (D_in * D_out + D_out * D_out) * 2
                 + 2 * 4 * 8 * D_out * 4
                 + 2 * 8 * D_out * 4
                 + (cache_bytes if use_cache else 0))
    vmem_limit = int(min(96 * 1024 * 1024, max(32 * 1024 * 1024, 2 * vmem_plan)))

    common_in_specs = [
        pl.BlockSpec((D_in, D_out), lambda p, i: (0, 0)),     # W1 resident
        pl.BlockSpec((1, D_out), lambda p, i: (0, 0)),        # b1
        pl.BlockSpec((D_out, D_out), lambda p, i: (0, 0)),    # W2 resident
        pl.BlockSpec((1, D_out), lambda p, i: (0, 0)),        # b2
        pl.BlockSpec((1, D_out), lambda p, i: (0, 0)),        # gamma
        pl.BlockSpec((1, D_out), lambda p, i: (0, 0)),        # beta
    ]

    if use_cache:
        kernel = functools.partial(_geu_kernel_cached, batch_size=B)
        # Phase 1 never touches x: pin its block index to 0 so x is only
        # streamed from HBM once (during the stats pass).
        x_spec = pl.BlockSpec((tb, D_in), lambda p, i: (i * (1 - p), 0))
        scratch = [pltpu.VMEM((nb, tb, D_out), jnp.float32),   # cached h
                   pltpu.VMEM((nb, tb, D_out), jnp.float32),   # cached x1
                   pltpu.VMEM((1, D_out), jnp.float32),        # sum(x1)
                   pltpu.VMEM((1, D_out), jnp.float32)]        # sum(x1*x1)
    else:
        kernel = functools.partial(_geu_kernel_recompute, batch_size=B)
        x_spec = pl.BlockSpec((tb, D_in), lambda p, i: (i, 0))
        scratch = [pltpu.VMEM((1, D_out), jnp.float32),
                   pltpu.VMEM((1, D_out), jnp.float32)]

    out = pl.pallas_call(
        kernel,
        out_shape=jax.ShapeDtypeStruct((b_pad, D_out), out_dtype),
        grid_spec=pltpu.PrefetchScalarGridSpec(
            num_scalar_prefetch=0,
            grid=(2, nb),  # (phase, batch tile); phase is outermost
            in_specs=[x_spec] + common_in_specs,
            # Phase 0 never writes output: keep its steps on block 0 so no
            # garbage tiles are flushed; phase 1 (p==1) visits (i, 0).
            out_specs=pl.BlockSpec((tb, D_out), lambda p, i: (i * p, 0)),
            scratch_shapes=scratch,
        ),
        compiler_params=pltpu.CompilerParams(
            # Both axes sequential: phase ordering + cross-tile BN accumulation.
            dimension_semantics=("arbitrary", "arbitrary"),
            vmem_limit_bytes=vmem_limit,
        ),
        cost_estimate=pl.CostEstimate(flops=flops,
                                      transcendentals=transcendentals,
                                      bytes_accessed=bytes_accessed),
    )(xb, w1b, b1f, w2b, b2f, gammaf, betaf)

    return out[:B]


def _reference(x, w1, b1, w2, b2, gamma, beta):
    # Matches the kernel's matmul precision (bf16 operands, f32 accumulation);
    # everything else in f32.
    h = jnp.dot(x.astype(jnp.bfloat16), w1.astype(jnp.bfloat16),
                preferred_element_type=jnp.float32) + b1
    x1 = jnp.dot(h.astype(jnp.bfloat16), w2.astype(jnp.bfloat16),
                 preferred_element_type=jnp.float32) + b2
    mean = jnp.mean(x1, axis=0, keepdims=True)
    var = jnp.mean((x1 - mean) ** 2, axis=0, keepdims=True)
    x1 = (x1 - mean) / jnp.sqrt(var + 1e-5) * gamma + beta
    g = h * jax.nn.sigmoid(x1)
    n = jnp.sqrt(jnp.sum(g * g, axis=1, keepdims=True))
    return g / jnp.maximum(n, 1e-12)


if __name__ == "__main__":
    B, D_in, D_out = 12, 128, 128

    key = jax.random.PRNGKey(0)
    kx, kw1, kb1, kw2, kb2 = jax.random.split(key, 5)

    x = jax.random.normal(kx, (B, D_in), dtype=jnp.float32)

    # Deterministic parameter init (PyTorch Linear-like uniform scaling).
    lim1 = 1.0 / (D_in ** 0.5)
    w1 = jax.random.uniform(kw1, (D_in, D_out), jnp.float32, -lim1, lim1)
    b1 = jax.random.uniform(kb1, (1, D_out), jnp.float32, -lim1, lim1)
    lim2 = 1.0 / (D_out ** 0.5)
    w2 = jax.random.uniform(kw2, (D_out, D_out), jnp.float32, -lim2, lim2)
    b2 = jax.random.uniform(kb2, (1, D_out), jnp.float32, -lim2, lim2)
    gamma = jnp.ones((1, D_out), jnp.float32)   # BatchNorm1d weight init
    beta = jnp.zeros((1, D_out), jnp.float32)   # BatchNorm1d bias init

    ref = _reference(x, w1, b1, w2, b2, gamma, beta)

    # block_b=8 exercises the multi-tile two-phase BatchNorm path
    # (B=12 -> padded to 16 -> 2 batch tiles, padded rows masked in the stats).
    # Path 1: VMEM-cached activations (phase 1 does no matmuls, x read once).
    out_cached = gated_embedding_unit(x, w1, b1, w2, b2, gamma, beta, block_b=8)
    out_cached = jax.block_until_ready(out_cached)
    assert out_cached.shape == (B, D_out)
    err = float(jnp.max(jnp.abs(out_cached - ref)))
    assert jnp.allclose(out_cached, ref, rtol=0.0, atol=2e-2), \
        f"cached path max abs err = {err}"

    # Path 2: recompute fallback (activation cache disabled).
    out_rec = gated_embedding_unit(x, w1, b1, w2, b2, gamma, beta,
                                   block_b=8, max_cache_bytes=0)
    out_rec = jax.block_until_ready(out_rec)
    assert out_rec.shape == (B, D_out)
    err = float(jnp.max(jnp.abs(out_rec - ref)))
    assert jnp.allclose(out_rec, ref, rtol=0.0, atol=2e-2), \
        f"recompute path max abs err = {err}"

    print("KERNEL_OK")
</pallas_src>

<mosaic_0001>
module attributes {stable_mosaic.version = 11 : i64} {
  func.func @_geu_kernel_cached(%arg0: i32, %arg1: i32, %arg2: memref<8x128xbf16, #tpu.memory_space<vmem>>, %arg3: memref<128x128xbf16, #tpu.memory_space<vmem>>, %arg4: memref<1x128xf32, #tpu.memory_space<vmem>>, %arg5: memref<128x128xbf16, #tpu.memory_space<vmem>>, %arg6: memref<1x128xf32, #tpu.memory_space<vmem>>, %arg7: memref<1x128xf32, #tpu.memory_space<vmem>>, %arg8: memref<1x128xf32, #tpu.memory_space<vmem>>, %arg9: memref<8x128xf32, #tpu.memory_space<vmem>>, %arg10: memref<2x8x128xf32, #tpu.memory_space<vmem>>, %arg11: memref<2x8x128xf32, #tpu.memory_space<vmem>>, %arg12: memref<1x128xf32, #tpu.memory_space<vmem>>, %arg13: memref<1x128xf32, #tpu.memory_space<vmem>>) attributes {dimension_semantics = [#tpu.dimension_semantics<arbitrary>, #tpu.dimension_semantics<arbitrary>], iteration_bounds = array<i64: 2, 2>, scalar_prefetch = 0 : i64, scratch_operands = 4 : i64, tpu.core_type = #tpu.core_type<tc>, window_params = [{transform_indices = @transform_0, window_bounds = array<i64: 8, 128>}, {pipeline_mode = #tpu.pipeline_mode<synchronous>, transform_indices = @transform_1, window_bounds = array<i64: 128, 128>}, {pipeline_mode = #tpu.pipeline_mode<synchronous>, transform_indices = @transform_2, window_bounds = array<i64: 1, 128>}, {pipeline_mode = #tpu.pipeline_mode<synchronous>, transform_indices = @transform_3, window_bounds = array<i64: 128, 128>}, {pipeline_mode = #tpu.pipeline_mode<synchronous>, transform_indices = @transform_4, window_bounds = array<i64: 1, 128>}, {pipeline_mode = #tpu.pipeline_mode<synchronous>, transform_indices = @transform_5, window_bounds = array<i64: 1, 128>}, {pipeline_mode = #tpu.pipeline_mode<synchronous>, transform_indices = @transform_6, window_bounds = array<i64: 1, 128>}, {transform_indices = @transform_7, window_bounds = array<i64: 8, 128>}]} {
    %c0_i32 = arith.constant 0 : i32
    %0 = arith.cmpi eq, %arg0, %c0_i32 : i32
    %1 = arith.extui %0 : i1 to i32
    %c0_i32_0 = arith.constant 0 : i32
    %2 = arith.cmpi ne, %1, %c0_i32_0 : i32
    scf.if %2 {
      %c0_i32_2 = arith.constant 0 : i32
      %6 = arith.cmpi eq, %arg1, %c0_i32_2 : i32
      %7 = arith.extui %6 : i1 to i32
      %c0_i32_3 = arith.constant 0 : i32
      %8 = arith.cmpi ne, %7, %c0_i32_3 : i32
      scf.if %8 {
        %cst_28 = arith.constant 0.000000e+00 : f32
        %50 = vector.broadcast %cst_28 : f32 to vector<1x128xf32>
        %c0_29 = arith.constant 0 : index
        %c0_30 = arith.constant 0 : index
        %51 = vector.load %arg12[%c0_29, %c0_30] : memref<1x128xf32, #tpu.memory_space<vmem>>, vector<1x128xf32>
        tpu.vector_store %arg12[%c0_29, %c0_30], %50 {strides = array<i32>} : memref<1x128xf32, #tpu.memory_space<vmem>>, vector<1x128xf32>,
        %cst_31 = arith.constant 0.000000e+00 : f32
        %52 = vector.broadcast %cst_31 : f32 to vector<1x128xf32>
        %c0_32 = arith.constant 0 : index
        %c0_33 = arith.constant 0 : index
        %53 = vector.load %arg13[%c0_32, %c0_33] : memref<1x128xf32, #tpu.memory_space<vmem>>, vector<1x128xf32>
        tpu.vector_store %arg13[%c0_32, %c0_33], %52 {strides = array<i32>} : memref<1x128xf32, #tpu.memory_space<vmem>>, vector<1x128xf32>,
      } else {
      }
      %c0 = arith.constant 0 : index
      %c0_4 = arith.constant 0 : index
      %9 = vector.load %arg2[%c0, %c0_4] : memref<8x128xbf16, #tpu.memory_space<vmem>>, vector<8x128xbf16>
      %c0_5 = arith.constant 0 : index
      %c0_6 = arith.constant 0 : index
      %10 = vector.load %arg3[%c0_5, %c0_6] : memref<128x128xbf16, #tpu.memory_space<vmem>>, vector<128x128xbf16>
      %cst = arith.constant dense<0.000000e+00> : vector<8x128xf32>
      %11 = tpu.matmul %9, %10, %cst {dimension_numbers = #tpu.dot_dimension_numbers<[1], [0], [0], [1], [0, 0, 1, 1], [], []>} : vector<8x128xbf16>, vector<128x128xbf16>, vector<8x128xf32> -> vector<8x128xf32>
      %c0_7 = arith.constant 0 : index
      %c0_8 = arith.constant 0 : index
      %12 = vector.load %arg4[%c0_7, %c0_8] : memref<1x128xf32, #tpu.memory_space<vmem>>, vector<1x128xf32>
      %13 = vector.broadcast %12 : vector<1x128xf32> to vector<8x128xf32>
      %14 = arith.addf %11, %13 : vector<8x128xf32>
      %15 = arith.truncf %14 : vector<8x128xf32> to vector<8x128xbf16>
      %c0_9 = arith.constant 0 : index
      %c0_10 = arith.constant 0 : index
      %16 = vector.load %arg5[%c0_9, %c0_10] : memref<128x128xbf16, #tpu.memory_space<vmem>>, vector<128x128xbf16>
      %cst_11 = arith.constant dense<0.000000e+00> : vector<8x128xf32>
      %17 = tpu.matmul %15, %16, %cst_11 {dimension_numbers = #tpu.dot_dimension_numbers<[1], [0], [0], [1], [0, 0, 1, 1], [], []>} : vector<8x128xbf16>, vector<128x128xbf16>, vector<8x128xf32> -> vector<8x128xf32>
      %c0_12 = arith.constant 0 : index
      %c0_13 = arith.constant 0 : index
      %18 = vector.load %arg6[%c0_12, %c0_13] : memref<1x128xf32, #tpu.memory_space<vmem>>, vector<1x128xf32>
      %19 = vector.broadcast %18 : vector<1x128xf32> to vector<8x128xf32>
      %20 = arith.addf %17, %19 : vector<8x128xf32>
      %21 = arith.index_cast %arg1 : i32 to index
      %c0_14 = arith.constant 0 : index
      %c0_15 = arith.constant 0 : index
      %22 = vector.load %arg10[%21, %c0_14, %c0_15] : memref<2x8x128xf32, #tpu.memory_space<vmem>>, vector<1x8x128xf32>
      %23 = vector.shape_cast %22 : vector<1x8x128xf32> to vector<8x128xf32>
      %24 = vector.shape_cast %14 : vector<8x128xf32> to vector<1x8x128xf32>
      tpu.vector_store %arg10[%21, %c0_14, %c0_15], %24 {strides = array<i32>} : memref<2x8x128xf32, #tpu.memory_space<vmem>>, vector<1x8x128xf32>,
      %25 = arith.index_cast %arg1 : i32 to index
      %c0_16 = arith.constant 0 : index
      %c0_17 = arith.constant 0 : index
      %26 = vector.load %arg11[%25, %c0_16, %c0_17] : memref<2x8x128xf32, #tpu.memory_space<vmem>>, vector<1x8x128xf32>
      %27 = vector.shape_cast %26 : vector<1x8x128xf32> to vector<8x128xf32>
      %28 = vector.shape_cast %20 : vector<8x128xf32> to vector<1x8x128xf32>
      tpu.vector_store %arg11[%25, %c0_16, %c0_17], %28 {strides = array<i32>} : memref<2x8x128xf32, #tpu.memory_space<vmem>>, vector<1x8x128xf32>,
      %29 = tpu.iota {dimensions = array<i32: 0>} : vector<8x1xi32>
      %c8_i32 = arith.constant 8 : i32
      %30 = arith.muli %arg1, %c8_i32 : i32
      %31 = vector.broadcast %30 : i32 to vector<8x1xi32>
      %32 = arith.addi %29, %31 : vector<8x1xi32>
      %c12_i32 = arith.constant 12 : i32
      %33 = vector.broadcast %c12_i32 : i32 to vector<8x1xi32>
      %34 = arith.cmpi slt, %32, %33 : vector<8x1xi32>
      %35 = arith.extui %34 : vector<8x1xi1> to vector<8x1xi32>
      %36 = arith.sitofp %35 : vector<8x1xi32> to vector<8x1xf32>
      %37 = vector.broadcast %36 : vector<8x1xf32> to vector<8x128xf32>
      %38 = arith.mulf %20, %37 : vector<8x128xf32>
      %c0_18 = arith.constant 0 : index
      %c0_19 = arith.constant 0 : index
      %39 = vector.load %arg12[%c0_18, %c0_19] : memref<1x128xf32, #tpu.memory_space<vmem>>, vector<1x128xf32>
      %cst_20 = arith.constant dense<0.000000e+00> : vector<128xf32>
      %40 = vector.multi_reduction <add>, %38, %cst_20 [0] : vector<8x128xf32> to vector<128xf32>
      %41 = vector.shape_cast %40 : vector<128xf32> to vector<1x128xf32>
      %42 = arith.addf %39, %41 : vector<1x128xf32>
      %c0_21 = arith.constant 0 : index
      %c0_22 = arith.constant 0 : index
      %43 = vector.load %arg12[%c0_21, %c0_22] : memref<1x128xf32, #tpu.memory_space<vmem>>, vector<1x128xf32>
      tpu.vector_store %arg12[%c0_21, %c0_22], %42 {strides = array<i32>} : memref<1x128xf32, #tpu.memory_space<vmem>>, vector<1x128xf32>,
      %c0_23 = arith.constant 0 : index
      %c0_24 = arith.constant 0 : index
      %44 = vector.load %arg13[%c0_23, %c0_24] : memref<1x128xf32, #tpu.memory_space<vmem>>, vector<1x128xf32>
      %45 = arith.mulf %38, %38 : vector<8x128xf32>
      %cst_25 = arith.constant dense<0.000000e+00> : vector<128xf32>
      %46 = vector.multi_reduction <add>, %45, %cst_25 [0] : vector<8x128xf32> to vector<128xf32>
      %47 = vector.shape_cast %46 : vector<128xf32> to vector<1x128xf32>
      %48 = arith.addf %44, %47 : vector<1x128xf32>
      %c0_26 = arith.constant 0 : index
      %c0_27 = arith.constant 0 : index
      %49 = vector.load %arg13[%c0_26, %c0_27] : memref<1x128xf32, #tpu.memory_space<vmem>>, vector<1x128xf32>
      tpu.vector_store %arg13[%c0_26, %c0_27], %48 {strides = array<i32>} : memref<1x128xf32, #tpu.memory_space<vmem>>, vector<1x128xf32>,
    } else {
    }
    %c1_i32 = arith.constant 1 : i32
    %3 = arith.cmpi eq, %arg0, %c1_i32 : i32
    %4 = arith.extui %3 : i1 to i32
    %c0_i32_1 = arith.constant 0 : i32
    %5 = arith.cmpi ne, %4, %c0_i32_1 : i32
    scf.if %5 {
      %6 = arith.index_cast %arg1 : i32 to index
      %c0 = arith.constant 0 : index
      %c0_2 = arith.constant 0 : index
      %7 = vector.load %arg10[%6, %c0, %c0_2] : memref<2x8x128xf32, #tpu.memory_space<vmem>>, vector<1x8x128xf32>
      %8 = vector.shape_cast %7 : vector<1x8x128xf32> to vector<8x128xf32>
      %9 = arith.index_cast %arg1 : i32 to index
      %c0_3 = arith.constant 0 : index
      %c0_4 = arith.constant 0 : index
      %10 = vector.load %arg11[%9, %c0_3, %c0_4] : memref<2x8x128xf32, #tpu.memory_space<vmem>>, vector<1x8x128xf32>
      %11 = vector.shape_cast %10 : vector<1x8x128xf32> to vector<8x128xf32>
      %c0_5 = arith.constant 0 : index
      %c0_6 = arith.constant 0 : index
      %12 = vector.load %arg7[%c0_5, %c0_6] : memref<1x128xf32, #tpu.memory_space<vmem>>, vector<1x128xf32>
      %c0_7 = arith.constant 0 : index
      %c0_8 = arith.constant 0 : index
      %13 = vector.load %arg8[%c0_7, %c0_8] : memref<1x128xf32, #tpu.memory_space<vmem>>, vector<1x128xf32>
      %c0_9 = arith.constant 0 : index
      %c0_10 = arith.constant 0 : index
      %14 = vector.load %arg12[%c0_9, %c0_10] : memref<1x128xf32, #tpu.memory_space<vmem>>, vector<1x128xf32>
      %cst = arith.constant 0.0833333358 : f32
      %15 = vector.broadcast %cst : f32 to vector<1x128xf32>
      %16 = arith.mulf %14, %15 : vector<1x128xf32>
      %c0_11 = arith.constant 0 : index
      %c0_12 = arith.constant 0 : index
      %17 = vector.load %arg13[%c0_11, %c0_12] : memref<1x128xf32, #tpu.memory_space<vmem>>, vector<1x128xf32>
      %cst_13 = arith.constant 0.0833333358 : f32
      %18 = vector.broadcast %cst_13 : f32 to vector<1x128xf32>
      %19 = arith.mulf %17, %18 : vector<1x128xf32>
      %20 = arith.mulf %16, %16 : vector<1x128xf32>
      %21 = arith.subf %19, %20 : vector<1x128xf32>
      %22 = vector.broadcast %16 : vector<1x128xf32> to vector<8x128xf32>
      %23 = arith.subf %11, %22 : vector<8x128xf32>
      %cst_14 = arith.constant 9.99999974E-6 : f32
      %24 = vector.broadcast %cst_14 : f32 to vector<1x128xf32>
      %25 = arith.addf %21, %24 : vector<1x128xf32>
      %26 = math.rsqrt %25 : vector<1x128xf32>
      %27 = vector.broadcast %26 : vector<1x128xf32> to vector<8x128xf32>
      %28 = arith.mulf %23, %27 : vector<8x128xf32>
      %29 = vector.broadcast %12 : vector<1x128xf32> to vector<8x128xf32>
      %30 = arith.mulf %28, %29 : vector<8x128xf32>
      %31 = vector.broadcast %13 : vector<1x128xf32> to vector<8x128xf32>
      %32 = arith.addf %30, %31 : vector<8x128xf32>
      %cst_15 = arith.constant 0.000000e+00 : f32
      %33 = vector.broadcast %cst_15 : f32 to vector<8x128xf32>
      %34 = arith.subf %33, %32 : vector<8x128xf32>
      %35 = math.exp %34 : vector<8x128xf32>
      %cst_16 = arith.constant 1.000000e+00 : f32
      %36 = vector.broadcast %cst_16 : f32 to vector<8x128xf32>
      %37 = arith.addf %36, %35 : vector<8x128xf32>
      %38 = tpu.reciprocal %37 {approx = true} : vector<8x128xf32> -> vector<8x128xf32>
      %39 = arith.mulf %8, %38 : vector<8x128xf32>
      %40 = arith.mulf %39, %39 : vector<8x128xf32>
      %cst_17 = arith.constant dense<0.000000e+00> : vector<8xf32>
      %41 = vector.multi_reduction <add>, %40, %cst_17 [1] : vector<8x128xf32> to vector<8xf32>
      %42 = vector.shape_cast %41 : vector<8xf32> to vector<8x1xf32>
      %cst_18 = arith.constant 1.000000e-24 : f32
      %43 = vector.broadcast %cst_18 : f32 to vector<8x1xf32>
      %44 = arith.maximumf %42, %43 : vector<8x1xf32>
      %45 = math.rsqrt %44 : vector<8x1xf32>
      %46 = vector.broadcast %45 : vector<8x1xf32> to vector<8x128xf32>
      %47 = arith.mulf %39, %46 : vector<8x128xf32>
      %c0_19 = arith.constant 0 : index
      %c0_20 = arith.constant 0 : index
      %48 = vector.load %arg9[%c0_19, %c0_20] : memref<8x128xf32, #tpu.memory_space<vmem>>, vector<8x128xf32>
      tpu.vector_store %arg9[%c0_19, %c0_20], %47 {strides = array<i32>} : memref<8x128xf32, #tpu.memory_space<vmem>>, vector<8x128xf32>,
    } else {
    }
    return
  }
  func.func @transform_0(%arg0: i32, %arg1: i32) -> (i32, i32) {
    %c1_i32 = arith.constant 1 : i32
    %0 = arith.subi %c1_i32, %arg0 : i32
    %1 = arith.muli %arg1, %0 : i32
    %c0_i32 = arith.constant 0 : i32
    %c0_i32_0 = arith.constant 0 : i32
    return %1, %c0_i32 : i32, i32
  }
  func.func @transform_1(%arg0: i32, %arg1: i32) -> (i32, i32) {
    %c0_i32 = arith.constant 0 : i32
    %c0_i32_0 = arith.constant 0 : i32
    %c0_i32_1 = arith.constant 0 : i32
    return %c0_i32, %c0_i32_0 : i32, i32
  }
  func.func @transform_2(%arg0: i32, %arg1: i32) -> (i32, i32) {
    %c0_i32 = arith.constant 0 : i32
    %c0_i32_0 = arith.constant 0 : i32
    %c0_i32_1 = arith.constant 0 : i32
    return %c0_i32, %c0_i32_0 : i32, i32
  }
  func.func @transform_3(%arg0: i32, %arg1: i32) -> (i32, i32) {
    %c0_i32 = arith.constant 0 : i32
    %c0_i32_0 = arith.constant 0 : i32
    %c0_i32_1 = arith.constant 0 : i32
    return %c0_i32, %c0_i32_0 : i32, i32
  }
  func.func @transform_4(%arg0: i32, %arg1: i32) -> (i32, i32) {
    %c0_i32 = arith.constant 0 : i32
    %c0_i32_0 = arith.constant 0 : i32
    %c0_i32_1 = arith.constant 0 : i32
    return %c0_i32, %c0_i32_0 : i32, i32
  }
  func.func @transform_5(%arg0: i32, %arg1: i32) -> (i32, i32) {
    %c0_i32 = arith.constant 0 : i32
    %c0_i32_0 = arith.constant 0 : i32
    %c0_i32_1 = arith.constant 0 : i32
    return %c0_i32, %c0_i32_0 : i32, i32
  }
  func.func @transform_6(%arg0: i32, %arg1: i32) -> (i32, i32) {
    %c0_i32 = arith.constant 0 : i32
    %c0_i32_0 = arith.constant 0 : i32
    %c0_i32_1 = arith.constant 0 : i32
    return %c0_i32, %c0_i32_0 : i32, i32
  }
  func.func @transform_7(%arg0: i32, %arg1: i32) -> (i32, i32) {
    %0 = arith.muli %arg1, %arg0 : i32
    %c0_i32 = arith.constant 0 : i32
    %c0_i32_0 = arith.constant 0 : i32
    return %0, %c0_i32 : i32, i32
  }
}

</mosaic_0001>

<llo_original>
// kernel: tpu_custom_call.1
$region0: #{tpu_custom_call.1}
  #allocation0 [shape = 'u32[]', space=smem, size = 0x4, offset = 0x4, fixed_abs, tag = 'smem constant byte address 0x4 - core index']
  #allocation1 [shape = 'u32[144,128]{1,0:T(1,128)}', space=vmem, size = 0x12000, scoped, tag = 'internal scratch']
  #allocation2 [shape = 'f32[2,8,128]{2,1,0:T(8,128)}', space=vmem, size = 0x2000, scoped, tag = 'scratch operand']
  #allocation3 [shape = 'f32[2,8,128]{2,1,0:T(8,128)}', space=vmem, size = 0x2000, scoped, tag = 'scratch operand']
  #allocation4 [shape = 'f32[1,128]{1,0:T(1,128)}', space=vmem, size = 0x200, scoped, tag = 'scratch operand']
  #allocation5 [shape = 'f32[1,128]{1,0:T(1,128)}', space=vmem, size = 0x200, scoped, tag = 'scratch operand']
  %s0 = inlined_call_operand.hbm [shape: bf16[16,128], index: 0, kind: input, shape index: {}]
  %s1 = inlined_call_operand.hbm [shape: bf16[128,128], index: 1, kind: input, shape index: {}]
  %s2 = inlined_call_operand.vmem [shape: f32[1,128], index: 2, kind: input, shape index: {}]
  %s3 = inlined_call_operand.hbm [shape: bf16[128,128], index: 3, kind: input, shape index: {}]
  %s4 = inlined_call_operand.vmem [shape: f32[1,128], index: 4, kind: input, shape index: {}]
  %s5 = inlined_call_operand.vmem [shape: f32[1,128], index: 5, kind: input, shape index: {}]
  %s6 = inlined_call_operand.vmem [shape: f32[1,128], index: 6, kind: input, shape index: {}]
  %s7 = inlined_call_operand.hbm [shape: f32[16,128], index: 7, kind: output, shape index: {}]
  %s8 = sld [smem:[#allocation0]]
  $region85: #{tpu_custom_call.1} parent=0
    _
  %s10 = ssub.s32 1, %s8
  %s11 = scalar_select 0, %s10, %s8
  $region1: #{tpu_custom_call.1} parent=0
    #allocation6 [shape = 'u8[4096]{0}', space=vmem, size = 0x1000, scoped, tag = 'input window, operand 0']
    #allocation7 [shape = 's32[2]{0}', space=sflag, size = 0x8, scoped, tag = 'scoped memory for tpu_custom_call.1']
    #allocation8 [shape = 's32[2]{0}', space=sflag, size = 0x8, scoped, tag = 'scoped memory for tpu_custom_call.1']
    #allocation9 [shape = 'u8[32768]{0}', space=vmem, size = 0x8000, scoped, tag = 'input window, operand 1, single buffered']
    #allocation10 [shape = 's32[1]{0}', space=sflag, size = 0x4, scoped, tag = 'scoped memory for tpu_custom_call.1']
    #allocation11 [shape = 'u8[32768]{0}', space=vmem, size = 0x8000, scoped, tag = 'input window, operand 3, single buffered']
    #allocation12 [shape = 'u8[8192]{0}', space=vmem, size = 0x2000, scoped, tag = 'output window, operand 0']
    %12 = vsyncpa [#allocation7], 0
    %s13 = scalar_lea.sflag [#allocation7], 1
    %14 = vsyncpa %s13, 0
    %15 = vsyncpa [#allocation10], 0
    %16 = vsyncpa [#allocation8], 0
    %s17 = scalar_lea.sflag [#allocation8], 1
    %18 = vsyncpa %s17, 0
    loop: start=0, step=1, limit=6
    $region2: #{tpu_custom_call.1} parent=1 // loop_pre_header
      _
    $region3: #{tpu_custom_call.1} parent=1 // loop_header
      %s20 = sphi 0, %s24
      %p21 = scmp.ge.s32.totalorder %s20, 6
      %s27 = sphi 0, %s39
      %s28 = sphi 0, %s35
      %s29 = sphi 0, %s27
      %s30 = sphi 0, %s28
      %s31 = sphi 0, %s29
      %s32 = sphi 0, %s30
      %s46 = sphi 0, %s48
      %s49 = sphi 0, %s46
      %s50 = sphi 0, %s49
      %s66 = sphi 0, %s50
      %s70 = sphi 0, %s70
      %s72 = sphi 0, %s70
      %s73 = sphi 0, %s72
      %s87 = sphi 0, %s73
      %s91 = sphi 0, %s91
      %s93 = sphi 0, %s91
      %s94 = sphi 0, %s93
      %s108 = sphi 0, %s94
      %s112 = sphi 0, %s112
      %s114 = sphi 0, %s112
      %s115 = sphi 0, %s114
      %s129 = sphi 0, %s115
      %s133 = sphi 0, %s133
      %s135 = sphi 0, %s133
      %s136 = sphi 0, %s135
      %s150 = sphi 0, %s136
      %s154 = sphi 0, %s154
      %s156 = sphi 0, %s154
      %s157 = sphi 0, %s156
      %s171 = sphi 0, %s157
      %s175 = sphi 0, %s175
      %s177 = sphi 0, %s175
      %s178 = sphi 0, %s177
      %s192 = sphi 0, %s178
      %s200 = sphi 0, %s202
      %s203 = sphi 0, %s200
      %s204 = sphi 0, %s203
      %s220 = sphi 0, %s204
    $region4: #{tpu_custom_call.1} parent=1 // loop_header_branch
      %23 = sbr.rel (%p21) target = $region8
    $region5: #{tpu_custom_call.1} parent=1 // loop_body
      %s25 = ssub.s32 %s20, 1
      %s26 = ssub.s32 %s20, 2
      %s33 = sadd.s32 1, %s28
      %p34 = scmp.ge.s32.totalorder %s33, 2
      %s35 = scalar_select %p34, 0, %s33
      %s36 = sadd.s32 1, %s27
      %s37 = scalar_select %p34, %s36, %s27
      %p38 = scmp.ge.s32.totalorder %s37, 2
      %s39 = scalar_select %p38, 0, %s37
      %s40 = ssub.s32 1, %s27
      %s41 = smul.u32 %s28, %s40
      %s42 = ssub.s32 1, %s39
      %s43 = smul.u32 %s35, %s42
      %s44 = ssub.s32 %s41, %s43
      %p45 = scmp.eq.s32.totalorder %s44, 0
      %s47 = sadd.s32 %s46, 1
      %s48 = scalar_select %p45, %s46, %s47
      %p51 = pneg %p45
      %p52 = scmp.eq.s32.totalorder %s20, 3
      %p53 = por %p51, %p52
      %p54 = scmp.ne.s32.totalorder %s46, %s49
      %p55 = scmp.eq.s32.totalorder %s20, 0
      %p56 = por %p54, %p55
      %p57 = scmp.ne.s32.totalorder %s46, %s49
      %p58 = scmp.eq.s32.totalorder %s25, 3
      %p59 = por %p57, %p58
      %p60 = scmp.ne.s32.totalorder %s49, %s50
      %p61 = scmp.eq.s32.totalorder %s25, 0
      %p62 = por %p60, %p61
      %p63 = scmp.ne.s32.totalorder %s49, %s50
      %p64 = scmp.eq.s32.totalorder %s26, 3
      %p65 = por %p63, %p64
      %p67 = scmp.ne.s32.totalorder %s50, %s66
      %p68 = scmp.eq.s32.totalorder %s26, 0
      %p69 = por %p67, %p68
      %s71 = sadd.s32 %s70, 1
      %p74 = scmp.eq.s32.totalorder %s20, 3
      %p75 = scmp.ne.s32.totalorder %s70, %s72
      %p76 = scmp.eq.s32.totalorder %s20, 0
      %p77 = por %p75, %p76
      %p78 = scmp.ne.s32.totalorder %s70, %s72
      %p79 = scmp.eq.s32.totalorder %s25, 3
      %p80 = por %p78, %p79
      %p81 = scmp.ne.s32.totalorder %s72, %s73
      %p82 = scmp.eq.s32.totalorder %s25, 0
      %p83 = por %p81, %p82
      %p84 = scmp.ne.s32.totalorder %s72, %s73
      %p85 = scmp.eq.s32.totalorder %s26, 3
      %p86 = por %p84, %p85
      %p88 = scmp.ne.s32.totalorder %s73, %s87
      %p89 = scmp.eq.s32.totalorder %s26, 0
      %p90 = por %p88, %p89
      %s92 = sadd.s32 %s91, 1
      %p95 = scmp.eq.s32.totalorder %s20, 3
      %p96 = scmp.ne.s32.totalorder %s91, %s93
      %p97 = scmp.eq.s32.totalorder %s20, 0
      %p98 = por %p96, %p97
      %p99 = scmp.ne.s32.totalorder %s91, %s93
      %p100 = scmp.eq.s32.totalorder %s25, 3
      %p101 = por %p99, %p100
      %p102 = scmp.ne.s32.totalorder %s93, %s94
      %p103 = scmp.eq.s32.totalorder %s25, 0
      %p104 = por %p102, %p103
      %p105 = scmp.ne.s32.totalorder %s93, %s94
      %p106 = scmp.eq.s32.totalorder %s26, 3
      %p107 = por %p105, %p106
      %p109 = scmp.ne.s32.totalorder %s94, %s108
      %p110 = scmp.eq.s32.totalorder %s26, 0
      %p111 = por %p109, %p110
      %s113 = sadd.s32 %s112, 1
      %p116 = scmp.eq.s32.totalorder %s20, 3
      %p117 = scmp.ne.s32.totalorder %s112, %s114
      %p118 = scmp.eq.s32.totalorder %s20, 0
      %p119 = por %p117, %p118
      %p120 = scmp.ne.s32.totalorder %s112, %s114
      %p121 = scmp.eq.s32.totalorder %s25, 3
      %p122 = por %p120, %p121
      %p123 = scmp.ne.s32.totalorder %s114, %s115
      %p124 = scmp.eq.s32.totalorder %s25, 0
      %p125 = por %p123, %p124
      %p126 = scmp.ne.s32.totalorder %s114, %s115
      %p127 = scmp.eq.s32.totalorder %s26, 3
      %p128 = por %p126, %p127
      %p130 = scmp.ne.s32.totalorder %s115, %s129
      %p131 = scmp.eq.s32.totalorder %s26, 0
      %p132 = por %p130, %p131
      %s134 = sadd.s32 %s133, 1
      %p137 = scmp.eq.s32.totalorder %s20, 3
      %p138 = scmp.ne.s32.totalorder %s133, %s135
      %p139 = scmp.eq.s32.totalorder %s20, 0
      %p140 = por %p138, %p139
      %p141 = scmp.ne.s32.totalorder %s133, %s135
      %p142 = scmp.eq.s32.totalorder %s25, 3
      %p143 = por %p141, %p142
      %p144 = scmp.ne.s32.totalorder %s135, %s136
      %p145 = scmp.eq.s32.totalorder %s25, 0
      %p146 = por %p144, %p145
      %p147 = scmp.ne.s32.totalorder %s135, %s136
      %p148 = scmp.eq.s32.totalorder %s26, 3
      %p149 = por %p147, %p148
      %p151 = scmp.ne.s32.totalorder %s136, %s150
      %p152 = scmp.eq.s32.totalorder %s26, 0
      %p153 = por %p151, %p152
      %s155 = sadd.s32 %s154, 1
      %p158 = scmp.eq.s32.totalorder %s20, 3
      %p159 = scmp.ne.s32.totalorder %s154, %s156
      %p160 = scmp.eq.s32.totalorder %s20, 0
      %p161 = por %p159, %p160
      %p162 = scmp.ne.s32.totalorder %s154, %s156
      %p163 = scmp.eq.s32.totalorder %s25, 3
      %p164 = por %p162, %p163
      %p165 = scmp.ne.s32.totalorder %s156, %s157
      %p166 = scmp.eq.s32.totalorder %s25, 0
      %p167 = por %p165, %p166
      %p168 = scmp.ne.s32.totalorder %s156, %s157
      %p169 = scmp.eq.s32.totalorder %s26, 3
      %p170 = por %p168, %p169
      %p172 = scmp.ne.s32.totalorder %s157, %s171
      %p173 = scmp.eq.s32.totalorder %s26, 0
      %p174 = por %p172, %p173
      %s176 = sadd.s32 %s175, 1
      %p179 = scmp.eq.s32.totalorder %s20, 3
      %p180 = scmp.ne.s32.totalorder %s175, %s177
      %p181 = scmp.eq.s32.totalorder %s20, 0
      %p182 = por %p180, %p181
      %p183 = scmp.ne.s32.totalorder %s175, %s177
      %p184 = scmp.eq.s32.totalorder %s25, 3
      %p185 = por %p183, %p184
      %p186 = scmp.ne.s32.totalorder %s177, %s178
      %p187 = scmp.eq.s32.totalorder %s25, 0
      %p188 = por %p186, %p187
      %p189 = scmp.ne.s32.totalorder %s177, %s178
      %p190 = scmp.eq.s32.totalorder %s26, 3
      %p191 = por %p189, %p190
      %p193 = scmp.ne.s32.totalorder %s178, %s192
      %p194 = scmp.eq.s32.totalorder %s26, 0
      %p195 = por %p193, %p194
      %s196 = smul.u32 %s28, %s27
      %s197 = smul.u32 %s35, %s39
      %s198 = ssub.s32 %s196, %s197
      %p199 = scmp.eq.s32.totalorder %s198, 0
      %s201 = sadd.s32 %s200, 1
      %s202 = scalar_select %p199, %s200, %s201
      %p205 = pneg %p199
      %p206 = scmp.eq.s32.totalorder %s20, 3
      %p207 = por %p205, %p206
      %p208 = scmp.ne.s32.totalorder %s200, %s203
      %p209 = scmp.eq.s32.totalorder %s20, 0
      %p210 = por %p208, %p209
      %p211 = scmp.ne.s32.totalorder %s200, %s203
      %p212 = scmp.eq.s32.totalorder %s25, 3
      %p213 = por %p211, %p212
      %p214 = scmp.ne.s32.totalorder %s203, %s204
      %p215 = scmp.eq.s32.totalorder %s25, 0
      %p216 = por %p214, %p215
      %p217 = scmp.ne.s32.totalorder %s203, %s204
      %p218 = scmp.eq.s32.totalorder %s26, 3
      %p219 = por %p217, %p218
      %p221 = scmp.ne.s32.totalorder %s204, %s220
      %p222 = scmp.eq.s32.totalorder %s26, 0
      %p223 = por %p221, %p222
      %p224 = scmp.le.s32.totalorder 1, %s20
      %p225 = scmp.lt.s32.totalorder %s20, 5
      %p226 = pnand %p224, %p225
      %p227 = pneg %p226
      // Predicated region
      $region9: #{tpu_custom_call.1} parent=5 // pred_check
        _
      $region10: #{tpu_custom_call.1} parent=5 // pred_check_branch
        %229 = sbr.rel (%p226) target = $region12
      $region11: #{tpu_custom_call.1} parent=5 // pred_region
        %s230 = ssub.s32 %s20, 1
        // Predicated region
        $region13: #{tpu_custom_call.1} parent=11 // pred_check
          %p231 = pneg %p83
        $region14: #{tpu_custom_call.1} parent=11 // pred_check_branch
          %233 = sbr.rel (%p231) target = $region16
        $region15: #{tpu_custom_call.1} parent=11 // pred_region
          %s235 = ssub.s32 1024, 1024
          %236 = vsyncadd [#allocation10], %s235
          %s237 = sshll.u32 [#allocation9], 4
          %s238 = int_to_ptr.vmem [resolvable:$true] %s237
          %243 = dma.hbm_to_vmem [thread:$0]  %s1, 1024, %s238, [#allocation10], 64, 64, 4
        $region16: #{tpu_custom_call.1} parent=11 // pred_fallthru
          _
        // Predicated region
        $region17: #{tpu_custom_call.1} parent=11 // pred_check
          %p244 = pneg %p104
        $region18: #{tpu_custom_call.1} parent=11 // pred_check_branch
          %246 = sbr.rel (%p244) target = $region20
        $region19: #{tpu_custom_call.1} parent=11 // pred_region
          _
        $region20: #{tpu_custom_call.1} parent=11 // pred_fallthru
          _
        // Predicated region
        $region21: #{tpu_custom_call.1} parent=11 // pred_check
          %p247 = pneg %p125
        $region22: #{tpu_custom_call.1} parent=11 // pred_check_branch
          %249 = sbr.rel (%p247) target = $region24
        $region23: #{tpu_custom_call.1} parent=11 // pred_region
          %s251 = ssub.s32 1024, 1024
          %252 = vsyncadd [#allocation10], %s251
          %s253 = sshll.u32 [#allocation11], 4
          %s254 = int_to_ptr.vmem [resolvable:$true] %s253
          %259 = dma.hbm_to_vmem [thread:$0]  %s3, 1024, %s254, [#allocation10], 64, 64, 4
        $region24: #{tpu_custom_call.1} parent=11 // pred_fallthru
          _
        // Predicated region
        $region25: #{tpu_custom_call.1} parent=11 // pred_check
          %p260 = pneg %p146
        $region26: #{tpu_custom_call.1} parent=11 // pred_check_branch
          %262 = sbr.rel (%p260) target = $region28
        $region27: #{tpu_custom_call.1} parent=11 // pred_region
          _
        $region28: #{tpu_custom_call.1} parent=11 // pred_fallthru
          _
        // Predicated region
        $region29: #{tpu_custom_call.1} parent=11 // pred_check
          %p263 = pneg %p167
        $region30: #{tpu_custom_call.1} parent=11 // pred_check_branch
          %265 = sbr.rel (%p263) target = $region32
        $region31: #{tpu_custom_call.1} parent=11 // pred_region
          _
        $region32: #{tpu_custom_call.1} parent=11 // pred_fallthru
          _
        // Predicated region
        $region33: #{tpu_custom_call.1} parent=11 // pred_check
          %p266 = pneg %p188
        $region34: #{tpu_custom_call.1} parent=11 // pred_check_branch
          %268 = sbr.rel (%p266) target = $region36
        $region35: #{tpu_custom_call.1} parent=11 // pred_region
          _
        $region36: #{tpu_custom_call.1} parent=11 // pred_fallthru
          _
      $region12: #{tpu_custom_call.1} parent=5 // pred_fallthru
        _
      %p269 = scmp.lt.s32.totalorder %s20, 4
      // Predicated region
      $region37: #{tpu_custom_call.1} parent=5 // pred_check
        %p270 = pneg %p269
      $region38: #{tpu_custom_call.1} parent=5 // pred_check_branch
        %272 = sbr.rel (%p270) target = $region40
      $region39: #{tpu_custom_call.1} parent=5 // pred_region
        // Predicated region
        $region41: #{tpu_custom_call.1} parent=39 // pred_check
          %p273 = pneg %p56
        $region42: #{tpu_custom_call.1} parent=39 // pred_check_branch
          %275 = sbr.rel (%p273) target = $region44
        $region43: #{tpu_custom_call.1} parent=39 // pred_region
          %s276 = sand.u32 %s46, 1
          %s277 = scalar_lea.sflag [#allocation7], %s276
          %s278 = sand.u32 %s46, 1
          %s279 = smul.addr %s278, 4
          %s280 = scalar_lea.vmem [#allocation6], %s279
          %s281 = ssub.s32 1, %s27
          %s282 = smul.u32 %s28, %s281
          %s284 = ssub.s32 64, 64
          %285 = vsyncadd %s277, %s284
          %s286 = smul.addr %s282, 64
          %s287 = scalar_lea.hbm %s0, %s286
          %s289 = sshll.u32 %s280, 4
          %s290 = int_to_ptr.vmem [resolvable:$true] %s289
          %292 = dma.hbm_to_vmem [thread:$0]  %s287, 64, %s290, %s277
        $region44: #{tpu_custom_call.1} parent=39 // pred_fallthru
          _
      $region40: #{tpu_custom_call.1} parent=5 // pred_fallthru
        _
      %p293 = scmp.le.s32.totalorder 1, %s20
      %p294 = scmp.lt.s32.totalorder %s20, 5
      %p295 = pnand %p293, %p294
      %p296 = pneg %p295
      // Predicated region
      $region45: #{tpu_custom_call.1} parent=5 // pred_check
        _
      $region46: #{tpu_custom_call.1} parent=5 // pred_check_branch
        %298 = sbr.rel (%p295) target = $region48
      $region47: #{tpu_custom_call.1} parent=5 // pred_region
        %s299 = ssub.s32 %s20, 1
        %s300 = sand.u32 %s49, 1
        %s301 = scalar_lea.sflag [#allocation7], %s300
        %s302 = sand.u32 %s49, 1
        %s303 = smul.addr %s302, 4
        %s304 = scalar_lea.vmem [#allocation6], %s303
        // Predicated region
        $region49: #{tpu_custom_call.1} parent=47 // pred_check
          %p305 = pneg %p62
        $region50: #{tpu_custom_call.1} parent=47 // pred_check_branch
          %307 = sbr.rel (%p305) target = $region52
        $region51: #{tpu_custom_call.1} parent=47 // pred_region
          %308 = dma.done %s301, 64
        $region52: #{tpu_custom_call.1} parent=47 // pred_fallthru
          _
        // Predicated region
        $region53: #{tpu_custom_call.1} parent=47 // pred_check
          %p309 = pneg %p83
        $region54: #{tpu_custom_call.1} parent=47 // pred_check_branch
          %311 = sbr.rel (%p309) target = $region56
        $region55: #{tpu_custom_call.1} parent=47 // pred_region
          %312 = dma.done [#allocation10], 1024
        $region56: #{tpu_custom_call.1} parent=47 // pred_fallthru
          _
        // Predicated region
        $region57: #{tpu_custom_call.1} parent=47 // pred_check
          %p313 = pneg %p125
        $region58: #{tpu_custom_call.1} parent=47 // pred_check_branch
          %315 = sbr.rel (%p313) target = $region60
        $region59: #{tpu_custom_call.1} parent=47 // pred_region
          %316 = dma.done [#allocation10], 1024
        $region60: #{tpu_custom_call.1} parent=47 // pred_fallthru
          _
        %s317 = sand.u32 %s49, 1
        %s318 = scalar_lea.sflag [#allocation7], %s317
        %s319 = sand.u32 %s49, 1
        %s320 = smul.addr %s319, 4
        %s321 = scalar_lea.vmem [#allocation6], %s320
        %p322 = pneg %p62
        %p323 = pneg %p59
        %p324 = pneg %p83
        %p325 = pneg %p80
        %p326 = pneg %p104
        %p327 = pneg %p101
        %p328 = pneg %p125
        %p329 = pneg %p122
        %p330 = pneg %p146
        %p331 = pneg %p143
        %p332 = pneg %p167
        %p333 = pneg %p164
        %p334 = pneg %p188
        %p335 = pneg %p185
        %p336 = pneg %p216
        %p337 = pneg %p213
        %s338 = sand.u32 %s203, 1
        %s339 = scalar_lea.sflag [#allocation8], %s338
        %s340 = sand.u32 %s203, 1
        %s341 = smul.addr %s340, 8
        %s342 = scalar_lea.vmem [#allocation12], %s341
        %s343 = ssub.s32 1, %s29
        %s344 = smul.u32 %s30, %s343
        %s345 = smul.u32 %s30, %s29
        %p347 = scmp.eq.s32.totalorder %s29, 0
        // Predicated region
        $region61: #{tpu_custom_call.1} parent=47 // pred_check
          %p348 = pneg %p347
        $region62: #{tpu_custom_call.1} parent=47 // pred_check_branch
          %350 = sbr.rel (%p348) target = $region64
        $region63: #{tpu_custom_call.1} parent=47 // pred_region
          %p351 = scmp.eq.s32.totalorder %s30, 0
          // Predicated region
          $region65: #{tpu_custom_call.1} parent=63 // pred_check
            %p352 = pneg %p351
          $region66: #{tpu_custom_call.1} parent=63 // pred_check_branch
            %354 = sbr.rel (%p352) target = $region68
          $region67: #{tpu_custom_call.1} parent=63 // pred_region
            %355 = vst [vmem:[#allocation4] sm:$0x1] 0.0
            %356 = vst [vmem:[#allocation5] sm:$0x1] 0.0
          $region68: #{tpu_custom_call.1} parent=63 // pred_fallthru
            _
          %v357 = vld [vmem:[%s304] sm:$0xf]
          %v358 = vld [vmem:[#allocation9] sm:$0xf]
          %v359 = vld [vmem:[#allocation9 + $0x4] sm:$0xf]
          %v360 = vld [vmem:[#allocation9 + $0x8] sm:$0xf]
          %v361 = vld [vmem:[#allocation9 + $0xc] sm:$0xf]
          %v362 = vld [vmem:[#allocation9 + $0x10] sm:$0xf]
          %v363 = vld [vmem:[#allocation9 + $0x14] sm:$0xf]
          %v364 = vld [vmem:[#allocation9 + $0x18] sm:$0xf]
          %v365 = vld [vmem:[#allocation9 + $0x1c] sm:$0xf]
          %v366 = vld [vmem:[#allocation9 + $0x20] sm:$0xf]
          %v367 = vld [vmem:[#allocation9 + $0x24] sm:$0xf]
          %v368 = vld [vmem:[#allocation9 + $0x28] sm:$0xf]
          %v369 = vld [vmem:[#allocation9 + $0x2c] sm:$0xf]
          %v370 = vld [vmem:[#allocation9 + $0x30] sm:$0xf]
          %v371 = vld [vmem:[#allocation9 + $0x34] sm:$0xf]
          %v372 = vld [vmem:[#allocation9 + $0x38] sm:$0xf]
          %v373 = vld [vmem:[#allocation9 + $0x3c] sm:$0xf]
          %v374 = vld [vmem:[%s2] sm:$0x1]
          %v376 = vlaneseq
          %v377 = vshrl.u32 %v376, 7
          %v378 = vsub.s32 0, %v377
          %v379 = vrot.slane %v374, %v378
          %v397 = vunpack.c.l.b16 %v358
          %v398 = vunpack.c.l.b16 %v359
          %v399 = vunpack.c.l.b16 %v360
          %v400 = vunpack.c.l.b16 %v361
          %v401 = vunpack.c.l.b16 %v362
          %v402 = vunpack.c.l.b16 %v363
          %v403 = vunpack.c.l.b16 %v364
          %v404 = vunpack.c.l.b16 %v365
          %v405 = vunpack.c.l.b16 %v366
          %v406 = vunpack.c.l.b16 %v367
          %v407 = vunpack.c.l.b16 %v368
          %v408 = vunpack.c.l.b16 %v369
          %v409 = vunpack.c.l.b16 %v370
          %v410 = vunpack.c.l.b16 %v371
          %v411 = vunpack.c.l.b16 %v372
          %v412 = vunpack.c.l.b16 %v373
          %v413 = vpack.c.b16 %v398, %v397
          %v414 = vpack.c.b16 %v400, %v399
          %v415 = vpack.c.b16 %v402, %v401
          %v416 = vpack.c.b16 %v404, %v403
          %v417 = vpack.c.b16 %v406, %v405
          %v418 = vpack.c.b16 %v408, %v407
          %v419 = vpack.c.b16 %v410, %v409
          %v420 = vpack.c.b16 %v412, %v411
          %429 = vmatprep.subr.bf16.mxu0 0
          %430 = vmatpush1.bf16.msra.mxu0 %v413
          %431 = vmatprep.subr.bf16.mxu0 0
          %432 = vmatpush1.bf16.msra.mxu0 %v414
          %433 = vmatprep.subr.bf16.mxu0 0
          %434 = vmatpush1.bf16.msra.mxu0 %v415
          %435 = vmatprep.subr.bf16.mxu0 0
          %436 = vmatpush1.bf16.msra.mxu0 %v416
          %437 = vmatprep.subr.bf16.mxu0 0
          %438 = vmatpush1.bf16.msra.mxu0 %v417
          %439 = vmatprep.subr.bf16.mxu0 0
          %440 = vmatpush1.bf16.msra.mxu0 %v418
          %441 = vmatprep.subr.bf16.mxu0 0
          %442 = vmatpush1.bf16.msra.mxu0 %v419
          %443 = vmatprep.subr.bf16.mxu0 0
          %444 = vmatpush1.bf16.msra.mxu0 %v420
          %445 = vmatprep.subr.bf16.mxu0 0
          %446 = vmatpush1.bf16.msra.mxu0 0
          %447 = vmatprep.subr.bf16.mxu0 0
          %448 = vmatpush1.bf16.msra.mxu0 0
          %449 = vmatprep.subr.bf16.mxu0 0
          %450 = vmatpush1.bf16.msra.mxu0 0
          %451 = vmatprep.subr.bf16.mxu0 0
          %452 = vmatpush1.bf16.msra.mxu0 0
          %453 = vmatprep.subr.bf16.mxu0 0
          %454 = vmatpush1.bf16.msra.mxu0 0
          %455 = vmatprep.subr.bf16.mxu0 0
          %456 = vmatpush1.bf16.msra.mxu0 0
          %457 = vmatprep.subr.bf16.mxu0 0
          %458 = vmatpush1.bf16.msra.mxu0 0
          %459 = vmatprep.subr.bf16.mxu0 0
          %460 = vmatpush1.bf16.msra.mxu0 0
          %461 = vmatprep.mubr.bf16.mxu0 0
          %462 = vmatmul.mubr.bf16.gmra.mrb[0].mxu0 %v357
          %v463 = vpop.f32.mrb[0].mxu0
          %v464 = vadd.f32 %v379, %v463
          %v465 = vpop.f32.mrb[0].mxu0
          %v466 = vpop.f32.mrb[0].mxu0
          %v467 = vpop.f32.mrb[0].mxu0
          %468 = vdwg.mxu0
          %v469 = vpack.c.bf16 %v464, %v464
          %v470 = vld [vmem:[#allocation11] sm:$0xf]
          %v471 = vld [vmem:[#allocation11 + $0x4] sm:$0xf]
          %v472 = vld [vmem:[#allocation11 + $0x8] sm:$0xf]
          %v473 = vld [vmem:[#allocation11 + $0xc] sm:$0xf]
          %v474 = vld [vmem:[#allocation11 + $0x10] sm:$0xf]
          %v475 = vld [vmem:[#allocation11 + $0x14] sm:$0xf]
          %v476 = vld [vmem:[#allocation11 + $0x18] sm:$0xf]
          %v477 = vld [vmem:[#allocation11 + $0x1c] sm:$0xf]
          %v478 = vld [vmem:[#allocation11 + $0x20] sm:$0xf]
          %v479 = vld [vmem:[#allocation11 + $0x24] sm:$0xf]
          %v480 = vld [vmem:[#allocation11 + $0x28] sm:$0xf]
          %v481 = vld [vmem:[#allocation11 + $0x2c] sm:$0xf]
          %v482 = vld [vmem:[#allocation11 + $0x30] sm:$0xf]
          %v483 = vld [vmem:[#allocation11 + $0x34] sm:$0xf]
          %v484 = vld [vmem:[#allocation11 + $0x38] sm:$0xf]
          %v485 = vld [vmem:[#allocation11 + $0x3c] sm:$0xf]
          %v486 = vld [vmem:[%s4] sm:$0x1]
          %v488 = vlaneseq
          %v489 = vshrl.u32 %v488, 7
          %v490 = vsub.s32 0, %v489
          %v491 = vrot.slane %v486, %v490
          %v509 = vunpack.c.l.b16 %v470
          %v510 = vunpack.c.l.b16 %v471
          %v511 = vunpack.c.l.b16 %v472
          %v512 = vunpack.c.l.b16 %v473
          %v513 = vunpack.c.l.b16 %v474
          %v514 = vunpack.c.l.b16 %v475
          %v515 = vunpack.c.l.b16 %v476
          %v516 = vunpack.c.l.b16 %v477
          %v517 = vunpack.c.l.b16 %v478
          %v518 = vunpack.c.l.b16 %v479
          %v519 = vunpack.c.l.b16 %v480
          %v520 = vunpack.c.l.b16 %v481
          %v521 = vunpack.c.l.b16 %v482
          %v522 = vunpack.c.l.b16 %v483
          %v523 = vunpack.c.l.b16 %v484
          %v524 = vunpack.c.l.b16 %v485
          %v525 = vpack.c.b16 %v510, %v509
          %v526 = vpack.c.b16 %v512, %v511
          %v527 = vpack.c.b16 %v514, %v513
          %v528 = vpack.c.b16 %v516, %v515
          %v529 = vpack.c.b16 %v518, %v517
          %v530 = vpack.c.b16 %v520, %v519
          %v531 = vpack.c.b16 %v522, %v521
          %v532 = vpack.c.b16 %v524, %v523
          %541 = vmatprep.subr.bf16.mxu0 0
          %542 = vmatpush1.bf16.msra.mxu0 %v525
          %543 = vmatprep.subr.bf16.mxu0 0
          %544 = vmatpush1.bf16.msra.mxu0 %v526
          %545 = vmatprep.subr.bf16.mxu0 0
          %546 = vmatpush1.bf16.msra.mxu0 %v527
          %547 = vmatprep.subr.bf16.mxu0 0
          %548 = vmatpush1.bf16.msra.mxu0 %v528
          %549 = vmatprep.subr.bf16.mxu0 0
          %550 = vmatpush1.bf16.msra.mxu0 %v529
          %551 = vmatprep.subr.bf16.mxu0 0
          %552 = vmatpush1.bf16.msra.mxu0 %v530
          %553 = vmatprep.subr.bf16.mxu0 0
          %554 = vmatpush1.bf16.msra.mxu0 %v531
          %555 = vmatprep.subr.bf16.mxu0 0
          %556 = vmatpush1.bf16.msra.mxu0 %v532
          %557 = vmatprep.subr.bf16.mxu0 0
          %558 = vmatpush1.bf16.msra.mxu0 0
          %559 = vmatprep.subr.bf16.mxu0 0
          %560 = vmatpush1.bf16.msra.mxu0 0
          %561 = vmatprep.subr.bf16.mxu0 0
          %562 = vmatpush1.bf16.msra.mxu0 0
          %563 = vmatprep.subr.bf16.mxu0 0
          %564 = vmatpush1.bf16.msra.mxu0 0
          %565 = vmatprep.subr.bf16.mxu0 0
          %566 = vmatpush1.bf16.msra.mxu0 0
          %567 = vmatprep.subr.bf16.mxu0 0
          %568 = vmatpush1.bf16.msra.mxu0 0
          %569 = vmatprep.subr.bf16.mxu0 0
          %570 = vmatpush1.bf16.msra.mxu0 0
          %571 = vmatprep.subr.bf16.mxu0 0
          %572 = vmatpush1.bf16.msra.mxu0 0
          %573 = vmatprep.mubr.bf16.mxu0 0
          %574 = vmatmul.mubr.bf16.gmra.mrb[0].mxu0 %v469
          %v575 = vpop.f32.mrb[0].mxu0
          %v576 = vadd.f32 %v491, %v575
          %v577 = vpop.f32.mrb[0].mxu0
          %v578 = vpop.f32.mrb[0].mxu0
          %v579 = vpop.f32.mrb[0].mxu0
          %580 = vdwg.mxu0
          %s581 = smul.u32 %s30, 8
          %s582 = scalar_lea.vmem [#allocation2], %s581
          %583 = vst [vmem:[%s582] sm:$0xff] %v464
          %s584 = scalar_lea.vmem [#allocation3], %s581
          %585 = vst [vmem:[%s584] sm:$0xff] %v576
          %v586 = vlaneseq
          %v587 = vshrl.u32 %v586, 7
          %v588 = vstv %s581
          %v589 = vadd.s32 %v587, %v588
          %vm590 = vcmp.lt.s32.totalorder %v589, 12
          %v591 = vsel %vm590, 1, 0
          %v592 = vcvt.s32.f32 %v591
          %v593 = vmul.f32 %v576, %v592
          %v594 = vld [vmem:[#allocation4] sm:$0x1]
          %v595 = vrot.slane %v593, 4
          %v596 = vadd.f32 %v593, %v595
          %v597 = vrot.slane %v596, 2
          %v598 = vadd.f32 %v596, %v597
          %v599 = vrot.slane %v598, 1
          %v600 = vadd.f32 %v598, %v599
          %v601 = vadd.f32 %v594, %v600
          %602 = vst [vmem:[#allocation4] sm:$0x1] %v601
          %v603 = vld [vmem:[#allocation5] sm:$0x1]
          %v604 = vmul.f32 %v593, %v593
          %v605 = vrot.slane %v604, 4
          %v606 = vadd.f32 %v604, %v605
          %v607 = vrot.slane %v606, 2
          %v608 = vadd.f32 %v606, %v607
          %v609 = vrot.slane %v608, 1
          %v610 = vadd.f32 %v608, %v609
          %v611 = vadd.f32 %v603, %v610
          %612 = vst [vmem:[#allocation5] sm:$0x1] %v611
        $region64: #{tpu_custom_call.1} parent=47 // pred_fallthru
          _
        %p613 = scmp.eq.s32.totalorder %s29, 1
        // Predicated region
        $region69: #{tpu_custom_call.1} parent=47 // pred_check
          %p614 = pneg %p613
        $region70: #{tpu_custom_call.1} parent=47 // pred_check_branch
          %616 = sbr.rel (%p614) target = $region72
        $region71: #{tpu_custom_call.1} parent=47 // pred_region
          %s617 = smul.u32 %s30, 8
          %s618 = scalar_lea.vmem [#allocation2], %s617
          %v619 = vld [vmem:[%s618] sm:$0xff]
          %s620 = scalar_lea.vmem [#allocation3], %s617
          %v621 = vld [vmem:[%s620] sm:$0xff]
          %v622 = vld [vmem:[%s5] sm:$0x1]
          %v623 = vld [vmem:[%s6] sm:$0x1]
          %v624 = vld [vmem:[#allocation4] sm:$0x1]
          %v625 = vmul.f32 %v624, 0.083333336
          %v626 = vld [vmem:[#allocation5] sm:$0x1]
          %v627 = vmul.f32 %v626, 0.083333336
          %v628 = vmul.f32 %v625, %v625
          %v629 = vsub.f32 %v627, %v628
          %v631 = vlaneseq
          %v632 = vshrl.u32 %v631, 7
          %v633 = vsub.s32 0, %v632
          %v634 = vrot.slane %v625, %v633
          %v636 = vsub.f32 %v621, %v634
          %v637 = vadd.f32 %v629, 1e-05
          %v638 = vrsqrt.pop %v637
          %v640 = vlaneseq
          %v641 = vshrl.u32 %v640, 7
          %v642 = vsub.s32 0, %v641
          %v643 = vrot.slane %v638, %v642
          %v645 = vmul.f32 %v636, %v643
          %v647 = vlaneseq
          %v648 = vshrl.u32 %v647, 7
          %v649 = vsub.s32 0, %v648
          %v650 = vrot.slane %v622, %v649
          %v652 = vmul.f32 %v645, %v650
          %v654 = vlaneseq
          %v655 = vshrl.u32 %v654, 7
          %v656 = vsub.s32 0, %v655
          %v657 = vrot.slane %v623, %v656
          %v659 = vadd.f32 %v652, %v657
          %v660 = vsub.f32 0.0, %v659
          %v661 = vmul.f32 %v660, 1.442695
          %v662 = vpow.pop %v661
          %v663 = vadd.f32 %v662, 1.0
          %v664 = vrcp.pop %v663
          %v665 = vmul.f32 %v619, %v664
          %v666 = vmul.f32 %v665, %v665
          %667 = vadd.xlane.f32.xlu0 %v666
          %v668 = vpop.xlane.xlu0 %667
          %v669 = vmax.f32 %v668, 1e-24
          %v670 = vrsqrt.pop %v669
          %v671 = vmul.f32 %v665, %v670
          %672 = vst [vmem:[%s342] sm:$0xff] %v671
        $region72: #{tpu_custom_call.1} parent=47 // pred_fallthru
          _
        %s673 = sand.u32 %s203, 1
        %s674 = scalar_lea.sflag [#allocation8], %s673
        %s675 = sand.u32 %s203, 1
        %s676 = smul.addr %s675, 8
        %s677 = scalar_lea.vmem [#allocation12], %s676
        // Predicated region
        $region73: #{tpu_custom_call.1} parent=47 // pred_check
          %p678 = pneg %p213
        $region74: #{tpu_custom_call.1} parent=47 // pred_check_branch
          %680 = sbr.rel (%p678) target = $region76
        $region75: #{tpu_custom_call.1} parent=47 // pred_region
          %s681 = smul.u32 %s30, %s29
          %s683 = ssub.s32 128, 128
          %684 = vsyncadd %s674, %s683
          %s685 = smul.addr %s681, 128
          %s686 = scalar_lea.hbm %s7, %s685
          %s688 = sshll.u32 %s677, 4
          %s689 = int_to_ptr.vmem [resolvable:$true] %s688
          %691 = dma.vmem_to_hbm [thread:$0]  %s689, 128, %s686, %s674
        $region76: #{tpu_custom_call.1} parent=47 // pred_fallthru
          _
      $region48: #{tpu_custom_call.1} parent=5 // pred_fallthru
        _
      %p692 = scmp.le.s32.totalorder 2, %s20
      // Predicated region
      $region77: #{tpu_custom_call.1} parent=5 // pred_check
        %p693 = pneg %p692
      $region78: #{tpu_custom_call.1} parent=5 // pred_check_branch
        %695 = sbr.rel (%p693) target = $region80
      $region79: #{tpu_custom_call.1} parent=5 // pred_region
        %s696 = ssub.s32 %s20, 2
        // Predicated region
        $region81: #{tpu_custom_call.1} parent=79 // pred_check
          %p697 = pneg %p219
        $region82: #{tpu_custom_call.1} parent=79 // pred_check_branch
          %699 = sbr.rel (%p697) target = $region84
        $region83: #{tpu_custom_call.1} parent=79 // pred_region
          %s700 = sand.u32 %s204, 1
          %s701 = scalar_lea.sflag [#allocation8], %s700
          %s702 = sand.u32 %s204, 1
          %s703 = smul.addr %s702, 8
          %s704 = scalar_lea.vmem [#allocation12], %s703
          %705 = dma.done %s701, 128
        $region84: #{tpu_custom_call.1} parent=79 // pred_fallthru
          _
      $region80: #{tpu_custom_call.1} parent=5 // pred_fallthru
        _
    $region6: #{tpu_custom_call.1} parent=1 // loop_footer
      %s24 = sadd.s32 1, %s20
    $region7: #{tpu_custom_call.1} parent=1 // loop_footer_branch
      %19 = sbr.rel target = $region3
    $region8: #{tpu_custom_call.1} parent=1 // loop_exit
      _
    %706 = vsyncpa [#allocation7], 1
    %s707 = scalar_lea.sflag [#allocation7], 1
    %708 = vsyncpa %s707, 1
    %709 = vsyncpa [#allocation10], 1
    %710 = vsyncpa [#allocation8], 1
    %s711 = scalar_lea.sflag [#allocation8], 1
    %712 = vsyncpa %s711, 1

</llo_original>
